<compile_context>
chip_gen: v5e
topology: v5e:2x2
jax: 0.10.0
libtpu: 0.0.40
codegen_flags: <defaults>
</compile_context>

<pallas_src>
import math

import jax
import jax.numpy as jnp
from jax.experimental import pallas as pl
from jax.experimental.pallas import tpu as pltpu

# Target bytes per DMA: large enough that per-DMA issue overhead is noise;
# several DMAs are kept in flight so the DMA engines stay busy end-to-end.
_CHUNK_BYTES = 16 * 1024 * 1024
_MAX_INFLIGHT = 4          # DMA semaphore slots / copies in flight
_MAX_CHUNKS = 64           # cap on trace-time unroll length


def _make_hbm_copy_kernel(shape0, rows_per_chunk, n_chunks, n_sems):
    """Kernel: stream x -> o (same shape, both refs left in HBM) using
    `n_chunks` leading-axis DMAs with at most `n_sems` in flight."""

    def kernel(x_ref, o_ref, sems):
        copies = []
        for i in range(n_chunks):           # unrolled at trace time (small)
            r0 = i * rows_per_chunk
            rows = min(rows_per_chunk, shape0 - r0)
            cp = pltpu.make_async_copy(
                x_ref.at[pl.ds(r0, rows)],
                o_ref.at[pl.ds(r0, rows)],
                sems.at[i % n_sems],
            )
            if i >= n_sems:
                # Reusing this semaphore slot: wait for its previous copy first.
                copies[i - n_sems].wait()
            cp.start()
            copies.append(cp)
        # Drain the copies still in flight.
        for cp in copies[max(0, n_chunks - n_sems):]:
            cp.wait()

    return kernel


def _infer_dim(dim, total):
    """torch-style .view() shape inference (single -1 allowed)."""
    dim = tuple(int(d) for d in dim)
    if dim.count(-1) > 1:
        raise ValueError("view: only one dimension may be -1")
    if dim.count(-1) == 1:
        known = math.prod(d for d in dim if d != -1)
        if known == 0 or total % known != 0:
            raise ValueError(
                f"view: cannot infer -1 in shape {dim} for input of size {total}")
        dim = tuple(total // known if d == -1 else d for d in dim)
    if math.prod(dim) != total:
        raise ValueError(f"view: shape {dim} is invalid for input of size {total}")
    return dim


def change_dim(x, dim, *, copy=True, chunk_bytes=_CHUNK_BYTES):
    """Equivalent of torch ``x.view(dim)``.

    copy=False : true view semantics -- metadata-only reshape, no kernel.
    copy=True  : materialize the element stream via a Pallas HBM->HBM DMA
                 copy kernel, then apply the (metadata) reshape.
    """
    total = x.size
    dim = _infer_dim(dim, total)

    if not copy:
        # A view is metadata-only; launching a kernel would be pure overhead.
        return x.reshape(dim)

    if total == 0 or x.ndim == 0:
        # Nothing to stream / no leading axis to chunk over.
        return jnp.reshape(x, dim)

    itemsize = jnp.dtype(x.dtype).itemsize
    shape0 = x.shape[0]
    row_bytes = itemsize * max(1, math.prod(x.shape[1:]))

    # Chunk along the leading axis (src and dst share shape and HBM layout,
    # so chunk starts/ends need no (8,128) padding -- DMAs are element-exact).
    rows_per_chunk = max(1, chunk_bytes // row_bytes, pl.cdiv(shape0, _MAX_CHUNKS))
    if 8 <= rows_per_chunk < shape0:
        rows_per_chunk -= rows_per_chunk % 8   # keep cuts tile-aligned (perf only)
    rows_per_chunk = min(rows_per_chunk, shape0)
    n_chunks = pl.cdiv(shape0, rows_per_chunk)
    n_sems = max(1, min(_MAX_INFLIGHT, n_chunks))

    out = pl.pallas_call(
        _make_hbm_copy_kernel(shape0, rows_per_chunk, n_chunks, n_sems),
        out_shape=jax.ShapeDtypeStruct(x.shape, x.dtype),
        in_specs=[pl.BlockSpec(memory_space=pl.ANY)],
        out_specs=pl.BlockSpec(memory_space=pl.ANY),
        scratch_shapes=[pltpu.SemaphoreType.DMA((n_sems,))],
        cost_estimate=pl.CostEstimate(
            flops=0, transcendentals=0, bytes_accessed=2 * total * itemsize),
    )(x)

    # Required by the module's semantics; metadata-level reshape of the copy.
    return out.reshape(dim)


if __name__ == "__main__":
    key = jax.random.PRNGKey(0)
    k0, k1, k2 = jax.random.split(key, 3)

    # 1) Small NCHW-like activation, torch-style -1 inference.
    x = jax.random.normal(k0, (2, 4, 16, 16), dtype=jnp.float32)
    ref = x.reshape(2, 4 * 16 * 16)

    y_view = change_dim(x, (2, -1), copy=False)       # metadata-only view path
    assert y_view.shape == ref.shape and bool(jnp.array_equal(y_view, ref))

    y = jax.block_until_ready(change_dim(x, (2, -1), copy=True))
    assert y.shape == ref.shape and y.dtype == x.dtype
    assert bool(jnp.array_equal(y, ref))

    # 2) Odd, non-(8,128)-aligned element count: previously a padded copy +
    #    slice (3x HBM traffic); now a single element-exact HBM->HBM DMA.
    x2 = jax.random.normal(k1, (3, 5, 7), dtype=jnp.float32)
    y2 = jax.block_until_ready(change_dim(x2, (-1,), copy=True))
    assert y2.shape == (3 * 5 * 7,)
    assert bool(jnp.array_equal(y2, x2.reshape(-1)))

    # 3) Tiny chunk size to exercise the multi-DMA in-flight window
    #    (8 chunks, 4 semaphores) on a small array.
    x3 = jax.random.normal(k2, (64, 128), dtype=jnp.float32)
    y3 = jax.block_until_ready(change_dim(x3, (16, 512), copy=True, chunk_bytes=4096))
    assert bool(jnp.array_equal(y3, x3.reshape(16, 512)))

    print("KERNEL_OK")
</pallas_src>

<mosaic_0001>
module attributes {stable_mosaic.version = 11 : i64} {
  func.func @kernel(%arg0: memref<2x4x16x16xf32, #tpu.memory_space<any>>, %arg1: memref<2x4x16x16xf32, #tpu.memory_space<any>>, %arg2: memref<1x!tpu.dma_semaphore, #tpu.memory_space<semaphore_mem>>) attributes {dimension_semantics = [], scalar_prefetch = 0 : i64, scratch_operands = 1 : i64, tpu.core_type = #tpu.core_type<tc>} {
    %c0_i32 = arith.constant 0 : i32
    %c0_i32_0 = arith.constant 0 : i32
    %c0_i32_1 = arith.constant 0 : i32
    %c0_i32_2 = arith.constant 0 : i32
    %c0_i32_3 = arith.constant 0 : i32
    %0 = tpu.memref_slice %arg0[%c0_i32_0, %c0_i32_1, %c0_i32_2, %c0_i32_3] : memref<2x4x16x16xf32, #tpu.memory_space<any>> -> memref<2x4x16x16xf32, #tpu.memory_space<any>>
    %c0_i32_4 = arith.constant 0 : i32
    %c0_i32_5 = arith.constant 0 : i32
    %c0_i32_6 = arith.constant 0 : i32
    %c0_i32_7 = arith.constant 0 : i32
    %1 = tpu.memref_slice %arg1[%c0_i32_4, %c0_i32_5, %c0_i32_6, %c0_i32_7] : memref<2x4x16x16xf32, #tpu.memory_space<any>> -> memref<2x4x16x16xf32, #tpu.memory_space<any>>
    %2 = tpu.memref_slice %arg2[%c0_i32] : memref<1x!tpu.dma_semaphore, #tpu.memory_space<semaphore_mem>> -> memref<1x!tpu.dma_semaphore, #tpu.memory_space<semaphore_mem>>
    %3 = tpu.memref_squeeze %2 : memref<1x!tpu.dma_semaphore, #tpu.memory_space<semaphore_mem>> -> memref<!tpu.dma_semaphore, #tpu.memory_space<semaphore_mem>>
    tpu.enqueue_dma source(%0 : memref<2x4x16x16xf32, #tpu.memory_space<any>>) target(%1 : memref<2x4x16x16xf32, #tpu.memory_space<any>>) target_semaphore(%3 : memref<!tpu.dma_semaphore, #tpu.memory_space<semaphore_mem>>)
    %c0_i32_8 = arith.constant 0 : i32
    %c0_i32_9 = arith.constant 0 : i32
    %c0_i32_10 = arith.constant 0 : i32
    %c0_i32_11 = arith.constant 0 : i32
    %c0_i32_12 = arith.constant 0 : i32
    %4 = tpu.memref_slice %arg0[%c0_i32_9, %c0_i32_10, %c0_i32_11, %c0_i32_12] : memref<2x4x16x16xf32, #tpu.memory_space<any>> -> memref<2x4x16x16xf32, #tpu.memory_space<any>>
    %c0_i32_13 = arith.constant 0 : i32
    %c0_i32_14 = arith.constant 0 : i32
    %c0_i32_15 = arith.constant 0 : i32
    %c0_i32_16 = arith.constant 0 : i32
    %5 = tpu.memref_slice %arg1[%c0_i32_13, %c0_i32_14, %c0_i32_15, %c0_i32_16] : memref<2x4x16x16xf32, #tpu.memory_space<any>> -> memref<2x4x16x16xf32, #tpu.memory_space<any>>
    %6 = tpu.memref_slice %arg2[%c0_i32_8] : memref<1x!tpu.dma_semaphore, #tpu.memory_space<semaphore_mem>> -> memref<1x!tpu.dma_semaphore, #tpu.memory_space<semaphore_mem>>
    %7 = tpu.memref_squeeze %6 : memref<1x!tpu.dma_semaphore, #tpu.memory_space<semaphore_mem>> -> memref<!tpu.dma_semaphore, #tpu.memory_space<semaphore_mem>>
    tpu.wait_dma2 semaphore(%7 : memref<!tpu.dma_semaphore, #tpu.memory_space<semaphore_mem>>) src(%4 : memref<2x4x16x16xf32, #tpu.memory_space<any>>) dst(%5 : memref<2x4x16x16xf32, #tpu.memory_space<any>>)
    return
  }
}

</mosaic_0001>

<llo_original>
// kernel: tpu_custom_call.1
$region0: #{tpu_custom_call.1}
  #allocation0 [shape = 'u32[]', space=smem, size = 0x4, offset = 0x4, fixed_abs, tag = 'smem constant byte address 0x4 - core index']
  #allocation1 [shape = 'u32[72,128]{1,0:T(1,128)}', space=vmem, size = 0x9000, scoped, tag = 'internal scratch']
  #allocation2 [shape = 's32[1]{0}', space=sflag, size = 0x4, scoped, tag = 'scratch operand']
  #allocation3 [shape = 's32[]', space=sflag, size = 0x4, offset = 0, fixed_abs, tag = 'sflag constant byte address 0x0 - dummy sync flag']
  #allocation4 [shape = 'u32[0]{0}', space=smem, size = 0, offset = 0, fixed_abs, tag = 'smem constant byte address 0x0 - null']
  %s0 = inlined_call_operand.hbm [shape: f32[2,4,16,16], index: 0, kind: input, shape index: {}]
  %s1 = inlined_call_operand.hbm [shape: f32[2,4,16,16], index: 1, kind: output, shape index: {}]
  %s2 = sld [smem:[#allocation0]]
  $region2: #{tpu_custom_call.1} parent=0
    _
  %s4 = ssub.s32 1, %s2
  %s5 = scalar_select 0, %s4, %s2
  %s7 = sshll.u32 1, 14
  %s8 = sxor.u32 4294967295, %s7
  %s10 = sshll.u32 %s0, 4
  %s11 = int_to_ptr.hbm [resolvable:$true] %s10
  %s12 = sshll.u32 %s1, 4
  %s13 = int_to_ptr.hbm [resolvable:$true] %s12
  %16 = dma.general %s11, 2048, %s13, [#allocation2], [#allocation3], [#allocation4], 0, 0
  %s17 = smul.u32 2, 4
  %s18 = smul.u32 %s17, 16
  %s19 = smul.u32 %s18, 1
  %s20 = sshll.u32 %s19, 4
  %21 = dma.done [#allocation2], %s20
  %22 = vsyncmov [#allocation2]
  %s23 = vpop.sfrf %22
  %p24 = scmp.eq.s32.totalorder %s23, 0
  %p25 = pneg %p24
  %27 = shalt.err (%p25)

</llo_original>
